<compile_context>
chip_gen: v7x
topology: tpu7x:2x2x1
jax: 0.10.0
libtpu: 0.0.40
codegen_flags: <defaults>
</compile_context>

<pallas_src>
import functools

import jax
import jax.numpy as jnp
from jax.experimental import pallas as pl
from jax.experimental.pallas import tpu as pltpu

LANE = 128      # vreg lane width
SUBLANE = 8     # vreg sublane count (f32)


def _round_up(n: int, m: int) -> int:
    return ((n + m - 1) // m) * m


def mlp_kernel(x_ref, w1_ref, b1_ref, w2_ref, b2_ref, w3_ref, b3_ref, o_ref):
    """One (TILE_B, K) activation tile against VMEM-resident, lane-padded weights."""
    x = x_ref[...]
    # fc1 + relu
    h1 = jnp.dot(x, w1_ref[...], preferred_element_type=jnp.float32)
    h1 = jnp.maximum(h1 + b1_ref[...], 0.0)
    # fc2 + relu
    h2 = jnp.dot(h1, w2_ref[...], preferred_element_type=jnp.float32)
    h2 = jnp.maximum(h2 + b2_ref[...], 0.0)
    # fc3 (no activation); epilogue stays f32 until the final store (v5e-friendly)
    out = jnp.dot(h2, w3_ref[...], preferred_element_type=jnp.float32) + b3_ref[...]
    o_ref[...] = out.astype(o_ref.dtype)


def _pad_params(params):
    """Zero-pad hidden/output feature dims to the 128-lane width so matmul
    N-dims and the output store are lane-dense.  In real use this is done once
    at parameter-prep time, not per forward call."""
    w1, b1, w2, b2, w3, b3 = params
    H1 = _round_up(w1.shape[1], LANE)   # 24  -> 128
    H2 = _round_up(w2.shape[1], LANE)   # 24  -> 128
    NO = _round_up(w3.shape[1], LANE)   # 2   -> 128
    w1p = jnp.pad(w1, ((0, 0), (0, H1 - w1.shape[1])))
    b1p = jnp.pad(b1, ((0, 0), (0, H1 - b1.shape[1])))
    w2p = jnp.pad(w2, ((0, H1 - w2.shape[0]), (0, H2 - w2.shape[1])))
    b2p = jnp.pad(b2, ((0, 0), (0, H2 - b2.shape[1])))
    w3p = jnp.pad(w3, ((0, H2 - w3.shape[0]), (0, NO - w3.shape[1])))
    b3p = jnp.pad(b3, ((0, 0), (0, NO - b3.shape[1])))
    return w1p, b1p, w2p, b2p, w3p, b3p


@functools.partial(jax.jit, static_argnames=("tile_b",))
def mlp_forward(x, params, *, tile_b=512):
    n_out = params[4].shape[1]
    B, K = x.shape
    dtype = x.dtype

    # Lane-dense parameter prep (see _pad_params).
    w1p, b1p, w2p, b2p, w3p, b3p = _pad_params(params)
    NO = w3p.shape[1]

    # Tile the batch over a real grid.  TILE_B of 256-1024 is the sweet spot on
    # large batches; small batches just round up to a sublane multiple.
    tb = min(tile_b, _round_up(B, SUBLANE))
    Bp = _round_up(B, tb)
    xp = jnp.pad(x, ((0, Bp - B), (0, 0)))

    out = pl.pallas_call(
        mlp_kernel,
        out_shape=jax.ShapeDtypeStruct((Bp, NO), dtype),
        grid_spec=pl.GridSpec(
            grid=(Bp // tb,),
            in_specs=[
                # Activations: one batch tile per grid step (pipelined DMA).
                pl.BlockSpec((tb, K), lambda i: (i, 0)),
                # Weights / biases: same block every step -> VMEM-resident.
                pl.BlockSpec(w1p.shape, lambda i: (0, 0)),
                pl.BlockSpec(b1p.shape, lambda i: (0, 0)),
                pl.BlockSpec(w2p.shape, lambda i: (0, 0)),
                pl.BlockSpec(b2p.shape, lambda i: (0, 0)),
                pl.BlockSpec(w3p.shape, lambda i: (0, 0)),
                pl.BlockSpec(b3p.shape, lambda i: (0, 0)),
            ],
            out_specs=pl.BlockSpec((tb, NO), lambda i: (i, 0)),
        ),
        compiler_params=pltpu.CompilerParams(
            dimension_semantics=("parallel",),
        ),
    )(xp, w1p, b1p, w2p, b2p, w3p, b3p)

    # Strip the batch padding and the lane padding of the output features.
    return out[:B, :n_out]


def init_linear(key, fan_in, fan_out):
    # Deterministic init mirroring PyTorch's default U(-1/sqrt(fan_in), 1/sqrt(fan_in)).
    kw, kb = jax.random.split(key)
    bound = 1.0 / jnp.sqrt(float(fan_in))
    w = jax.random.uniform(kw, (fan_in, fan_out), jnp.float32, -bound, bound)
    b = jax.random.uniform(kb, (1, fan_out), jnp.float32, -bound, bound)
    return w, b


def _reference(x, params):
    w1, b1, w2, b2, w3, b3 = params
    h = jnp.maximum(x @ w1 + b1, 0.0)
    h = jnp.maximum(h @ w2 + b2, 0.0)
    return h @ w3 + b3


if __name__ == "__main__":
    key = jax.random.PRNGKey(0)
    k_x1, k_x2, k1, k2, k3 = jax.random.split(key, 5)

    # MLP: 4 -> 24 -> 24 -> 2
    w1, b1 = init_linear(k1, 4, 24)
    w2, b2 = init_linear(k2, 24, 24)
    w3, b3 = init_linear(k3, 24, 2)
    params = (w1, b1, w2, b2, w3, b3)

    # Case 1: small batch (sublane-aligned).
    x1 = jax.random.normal(k_x1, (8, 4), jnp.float32)
    out1 = jax.block_until_ready(mlp_forward(x1, params))
    assert out1.shape == (8, 2)
    assert jnp.allclose(out1, _reference(x1, params), atol=1e-4, rtol=1e-4)

    # Case 2: batch not a multiple of 8 (exercises the padding/slicing path).
    x2 = jax.random.normal(k_x2, (10, 4), jnp.float32)
    out2 = jax.block_until_ready(mlp_forward(x2, params))
    assert out2.shape == (10, 2)
    assert jnp.allclose(out2, _reference(x2, params), atol=1e-4, rtol=1e-4)

    print("KERNEL_OK")
</pallas_src>

<mosaic_0001>
module attributes {stable_mosaic.version = 11 : i64} {
  func.func @mlp_kernel(%arg0: i32, %arg1: memref<8x4xf32, #tpu.memory_space<vmem>>, %arg2: memref<4x128xf32, #tpu.memory_space<vmem>>, %arg3: memref<1x128xf32, #tpu.memory_space<vmem>>, %arg4: memref<128x128xf32, #tpu.memory_space<vmem>>, %arg5: memref<1x128xf32, #tpu.memory_space<vmem>>, %arg6: memref<128x128xf32, #tpu.memory_space<vmem>>, %arg7: memref<1x128xf32, #tpu.memory_space<vmem>>, %arg8: memref<8x128xf32, #tpu.memory_space<vmem>>) attributes {dimension_semantics = [#tpu.dimension_semantics<parallel>], iteration_bounds = array<i64: 1>, scalar_prefetch = 0 : i64, scratch_operands = 0 : i64, tpu.core_type = #tpu.core_type<tc>, window_params = [{transform_indices = @transform_0, window_bounds = array<i64: 8, 4>}, {pipeline_mode = #tpu.pipeline_mode<synchronous>, transform_indices = @transform_1, window_bounds = array<i64: 4, 128>}, {pipeline_mode = #tpu.pipeline_mode<synchronous>, transform_indices = @transform_2, window_bounds = array<i64: 1, 128>}, {pipeline_mode = #tpu.pipeline_mode<synchronous>, transform_indices = @transform_3, window_bounds = array<i64: 128, 128>}, {pipeline_mode = #tpu.pipeline_mode<synchronous>, transform_indices = @transform_4, window_bounds = array<i64: 1, 128>}, {pipeline_mode = #tpu.pipeline_mode<synchronous>, transform_indices = @transform_5, window_bounds = array<i64: 128, 128>}, {pipeline_mode = #tpu.pipeline_mode<synchronous>, transform_indices = @transform_6, window_bounds = array<i64: 1, 128>}, {transform_indices = @transform_7, window_bounds = array<i64: 8, 128>}]} {
    %c0 = arith.constant 0 : index
    %c0_0 = arith.constant 0 : index
    %0 = vector.load %arg1[%c0, %c0_0] : memref<8x4xf32, #tpu.memory_space<vmem>>, vector<8x4xf32>
    %c0_1 = arith.constant 0 : index
    %c0_2 = arith.constant 0 : index
    %1 = vector.load %arg2[%c0_1, %c0_2] : memref<4x128xf32, #tpu.memory_space<vmem>>, vector<4x128xf32>
    %cst = arith.constant dense<0.000000e+00> : vector<8x128xf32>
    %2 = tpu.matmul %0, %1, %cst {dimension_numbers = #tpu.dot_dimension_numbers<[1], [0], [0], [1], [0, 0, 1, 1], [], []>} : vector<8x4xf32>, vector<4x128xf32>, vector<8x128xf32> -> vector<8x128xf32>
    %c0_3 = arith.constant 0 : index
    %c0_4 = arith.constant 0 : index
    %3 = vector.load %arg3[%c0_3, %c0_4] : memref<1x128xf32, #tpu.memory_space<vmem>>, vector<1x128xf32>
    %4 = vector.broadcast %3 : vector<1x128xf32> to vector<8x128xf32>
    %5 = arith.addf %2, %4 : vector<8x128xf32>
    %cst_5 = arith.constant 0.000000e+00 : f32
    %6 = vector.broadcast %cst_5 : f32 to vector<8x128xf32>
    %7 = arith.maximumf %5, %6 : vector<8x128xf32>
    %c0_6 = arith.constant 0 : index
    %c0_7 = arith.constant 0 : index
    %8 = vector.load %arg4[%c0_6, %c0_7] : memref<128x128xf32, #tpu.memory_space<vmem>>, vector<128x128xf32>
    %cst_8 = arith.constant dense<0.000000e+00> : vector<8x128xf32>
    %9 = tpu.matmul %7, %8, %cst_8 {dimension_numbers = #tpu.dot_dimension_numbers<[1], [0], [0], [1], [0, 0, 1, 1], [], []>} : vector<8x128xf32>, vector<128x128xf32>, vector<8x128xf32> -> vector<8x128xf32>
    %c0_9 = arith.constant 0 : index
    %c0_10 = arith.constant 0 : index
    %10 = vector.load %arg5[%c0_9, %c0_10] : memref<1x128xf32, #tpu.memory_space<vmem>>, vector<1x128xf32>
    %11 = vector.broadcast %10 : vector<1x128xf32> to vector<8x128xf32>
    %12 = arith.addf %9, %11 : vector<8x128xf32>
    %cst_11 = arith.constant 0.000000e+00 : f32
    %13 = vector.broadcast %cst_11 : f32 to vector<8x128xf32>
    %14 = arith.maximumf %12, %13 : vector<8x128xf32>
    %c0_12 = arith.constant 0 : index
    %c0_13 = arith.constant 0 : index
    %15 = vector.load %arg6[%c0_12, %c0_13] : memref<128x128xf32, #tpu.memory_space<vmem>>, vector<128x128xf32>
    %cst_14 = arith.constant dense<0.000000e+00> : vector<8x128xf32>
    %16 = tpu.matmul %14, %15, %cst_14 {dimension_numbers = #tpu.dot_dimension_numbers<[1], [0], [0], [1], [0, 0, 1, 1], [], []>} : vector<8x128xf32>, vector<128x128xf32>, vector<8x128xf32> -> vector<8x128xf32>
    %c0_15 = arith.constant 0 : index
    %c0_16 = arith.constant 0 : index
    %17 = vector.load %arg7[%c0_15, %c0_16] : memref<1x128xf32, #tpu.memory_space<vmem>>, vector<1x128xf32>
    %18 = vector.broadcast %17 : vector<1x128xf32> to vector<8x128xf32>
    %19 = arith.addf %16, %18 : vector<8x128xf32>
    %c0_17 = arith.constant 0 : index
    %c0_18 = arith.constant 0 : index
    %20 = vector.load %arg8[%c0_17, %c0_18] : memref<8x128xf32, #tpu.memory_space<vmem>>, vector<8x128xf32>
    tpu.vector_store %arg8[%c0_17, %c0_18], %19 {strides = array<i32>} : memref<8x128xf32, #tpu.memory_space<vmem>>, vector<8x128xf32>,
    return
  }
  func.func @transform_0(%arg0: i32) -> (i32, i32) {
    %c0_i32 = arith.constant 0 : i32
    %c0_i32_0 = arith.constant 0 : i32
    return %arg0, %c0_i32 : i32, i32
  }
  func.func @transform_1(%arg0: i32) -> (i32, i32) {
    %c0_i32 = arith.constant 0 : i32
    %c0_i32_0 = arith.constant 0 : i32
    %c0_i32_1 = arith.constant 0 : i32
    return %c0_i32, %c0_i32_0 : i32, i32
  }
  func.func @transform_2(%arg0: i32) -> (i32, i32) {
    %c0_i32 = arith.constant 0 : i32
    %c0_i32_0 = arith.constant 0 : i32
    %c0_i32_1 = arith.constant 0 : i32
    return %c0_i32, %c0_i32_0 : i32, i32
  }
  func.func @transform_3(%arg0: i32) -> (i32, i32) {
    %c0_i32 = arith.constant 0 : i32
    %c0_i32_0 = arith.constant 0 : i32
    %c0_i32_1 = arith.constant 0 : i32
    return %c0_i32, %c0_i32_0 : i32, i32
  }
  func.func @transform_4(%arg0: i32) -> (i32, i32) {
    %c0_i32 = arith.constant 0 : i32
    %c0_i32_0 = arith.constant 0 : i32
    %c0_i32_1 = arith.constant 0 : i32
    return %c0_i32, %c0_i32_0 : i32, i32
  }
  func.func @transform_5(%arg0: i32) -> (i32, i32) {
    %c0_i32 = arith.constant 0 : i32
    %c0_i32_0 = arith.constant 0 : i32
    %c0_i32_1 = arith.constant 0 : i32
    return %c0_i32, %c0_i32_0 : i32, i32
  }
  func.func @transform_6(%arg0: i32) -> (i32, i32) {
    %c0_i32 = arith.constant 0 : i32
    %c0_i32_0 = arith.constant 0 : i32
    %c0_i32_1 = arith.constant 0 : i32
    return %c0_i32, %c0_i32_0 : i32, i32
  }
  func.func @transform_7(%arg0: i32) -> (i32, i32) {
    %c0_i32 = arith.constant 0 : i32
    %c0_i32_0 = arith.constant 0 : i32
    return %arg0, %c0_i32 : i32, i32
  }
}

</mosaic_0001>

<llo_original>
// kernel: mlp_forward.1
$region0: #{mlp_forward.1}
  #allocation0 [shape = 'u32[]', space=smem, size = 0x4, offset = 0x4, fixed_abs, tag = 'smem constant byte address 0x4 - core index']
  #allocation1 [shape = 'u32[144,128]{1,0:T(1,128)}', space=vmem, size = 0x12000, scoped, tag = 'internal scratch']
  %s0 = inlined_call_operand.vmem [shape: f32[8,4], index: 0, kind: input, shape index: {}]
  %s1 = inlined_call_operand.vmem [shape: f32[4,128], index: 1, kind: input, shape index: {}]
  %s2 = inlined_call_operand.vmem [shape: f32[1,128], index: 2, kind: input, shape index: {}]
  %s3 = inlined_call_operand.vmem [shape: f32[128,128], index: 3, kind: input, shape index: {}]
  %s4 = inlined_call_operand.vmem [shape: f32[1,128], index: 4, kind: input, shape index: {}]
  %s5 = inlined_call_operand.vmem [shape: f32[128,128], index: 5, kind: input, shape index: {}]
  %s6 = inlined_call_operand.vmem [shape: f32[1,128], index: 6, kind: input, shape index: {}]
  %s7 = inlined_call_operand.vmem [shape: f32[8,128], index: 7, kind: output, shape index: {}]
  %s8 = sld [smem:[#allocation0]]
  $region38: #{mlp_forward.1} parent=0
    _
  %s10 = ssub.s32 1, %s8
  %s11 = scalar_select 0, %s10, %s8
  // Predicated region
  $region2: #{mlp_forward.1} parent=0 // pred_check
    _
  $region3: #{mlp_forward.1} parent=0 // pred_check_branch
    %13 = sbr.rel (0) target = $region5
  $region4: #{mlp_forward.1} parent=0 // pred_region
    _
  $region5: #{mlp_forward.1} parent=0 // pred_fallthru
    _
  // Predicated region
  $region6: #{mlp_forward.1} parent=0 // pred_check
    _
  $region7: #{mlp_forward.1} parent=0 // pred_check_branch
    %15 = sbr.rel (0) target = $region9
  $region8: #{mlp_forward.1} parent=0 // pred_region
    _
  $region9: #{mlp_forward.1} parent=0 // pred_fallthru
    _
  // Predicated region
  $region10: #{mlp_forward.1} parent=0 // pred_check
    _
  $region11: #{mlp_forward.1} parent=0 // pred_check_branch
    %17 = sbr.rel (0) target = $region13
  $region12: #{mlp_forward.1} parent=0 // pred_region
    _
  $region13: #{mlp_forward.1} parent=0 // pred_fallthru
    _
  // Predicated region
  $region14: #{mlp_forward.1} parent=0 // pred_check
    _
  $region15: #{mlp_forward.1} parent=0 // pred_check_branch
    %19 = sbr.rel (0) target = $region17
  $region16: #{mlp_forward.1} parent=0 // pred_region
    _
  $region17: #{mlp_forward.1} parent=0 // pred_fallthru
    _
  // Predicated region
  $region18: #{mlp_forward.1} parent=0 // pred_check
    _
  $region19: #{mlp_forward.1} parent=0 // pred_check_branch
    %21 = sbr.rel (0) target = $region21
  $region20: #{mlp_forward.1} parent=0 // pred_region
    _
  $region21: #{mlp_forward.1} parent=0 // pred_fallthru
    _
  // Predicated region
  $region22: #{mlp_forward.1} parent=0 // pred_check
    _
  $region23: #{mlp_forward.1} parent=0 // pred_check_branch
    %23 = sbr.rel (0) target = $region25
  $region24: #{mlp_forward.1} parent=0 // pred_region
    _
  $region25: #{mlp_forward.1} parent=0 // pred_fallthru
    _
  // Predicated region
  $region26: #{mlp_forward.1} parent=0 // pred_check
    _
  $region27: #{mlp_forward.1} parent=0 // pred_check_branch
    %25 = sbr.rel (0) target = $region29
  $region28: #{mlp_forward.1} parent=0 // pred_region
    _
  $region29: #{mlp_forward.1} parent=0 // pred_fallthru
    _
  %v26 = vld [vmem:[%s0] sm:$0xff]
  %v27 = vld [vmem:[%s1] sm:$0xf]
  %v28 = vld [vmem:[%s2] sm:$0x1]
  %v30 = vlaneseq
  %v31 = vshrl.u32 %v30, 7
  %v32 = vsub.s32 0, %v31
  %v33 = vrot.slane %v28, %v32
  %vm35 = vcmask 31744
  %v37 = vsel %vm35, %v26, 0
  %vm39 = vcmask 1043456
  %v41 = vsel %vm39, %v27, 0
  %43 = vmatprep.subr.mxu0 0.0
  %44 = vmatpush1.msra.mxu0 %v41
  %45 = vmatprep.subr.mxu0 0.0
  %46 = vmatpush1.msra.mxu0 0.0
  %47 = vmatprep.subr.mxu0 0.0
  %48 = vmatpush1.msra.mxu0 0.0
  %49 = vmatprep.subr.mxu0 0.0
  %50 = vmatpush1.msra.mxu0 0.0
  %51 = vmatprep.subr.mxu0 0.0
  %52 = vmatpush1.msra.mxu0 0.0
  %53 = vmatprep.subr.mxu0 0.0
  %54 = vmatpush1.msra.mxu0 0.0
  %55 = vmatprep.subr.mxu0 0.0
  %56 = vmatpush1.msra.mxu0 0.0
  %57 = vmatprep.subr.mxu0 0.0
  %58 = vmatpush1.msra.mxu0 0.0
  %59 = vmatprep.subr.mxu0 0.0
  %60 = vmatpush1.msra.mxu0 0.0
  %61 = vmatprep.subr.mxu0 0.0
  %62 = vmatpush1.msra.mxu0 0.0
  %63 = vmatprep.subr.mxu0 0.0
  %64 = vmatpush1.msra.mxu0 0.0
  %65 = vmatprep.subr.mxu0 0.0
  %66 = vmatpush1.msra.mxu0 0.0
  %67 = vmatprep.subr.mxu0 0.0
  %68 = vmatpush1.msra.mxu0 0.0
  %69 = vmatprep.subr.mxu0 0.0
  %70 = vmatpush1.msra.mxu0 0.0
  %71 = vmatprep.subr.mxu0 0.0
  %72 = vmatpush1.msra.mxu0 0.0
  %73 = vmatprep.subr.mxu0 0.0
  %74 = vmatpush1.msra.mxu0 0.0
  %75 = vmatprep.subr.mxu0 0.0
  %76 = vmatpush1.msra.mxu0 0.0
  %77 = vmatprep.subr.mxu0 0.0
  %78 = vmatpush1.msra.mxu0 0.0
  %79 = vmatprep.subr.mxu0 0.0
  %80 = vmatpush1.msra.mxu0 0.0
  %81 = vmatprep.subr.mxu0 0.0
  %82 = vmatpush1.msra.mxu0 0.0
  %83 = vmatprep.subr.mxu0 0.0
  %84 = vmatpush1.msra.mxu0 0.0
  %85 = vmatprep.subr.mxu0 0.0
  %86 = vmatpush1.msra.mxu0 0.0
  %87 = vmatprep.subr.mxu0 0.0
  %88 = vmatpush1.msra.mxu0 0.0
  %89 = vmatprep.subr.mxu0 0.0
  %90 = vmatpush1.msra.mxu0 0.0
  %91 = vmatprep.subr.mxu0 0.0
  %92 = vmatpush1.msra.mxu0 0.0
  %93 = vmatprep.subr.mxu0 0.0
  %94 = vmatpush1.msra.mxu0 0.0
  %95 = vmatprep.subr.mxu0 0.0
  %96 = vmatpush1.msra.mxu0 0.0
  %97 = vmatprep.subr.mxu0 0.0
  %98 = vmatpush1.msra.mxu0 0.0
  %99 = vmatprep.subr.mxu0 0.0
  %100 = vmatpush1.msra.mxu0 0.0
  %101 = vmatprep.subr.mxu0 0.0
  %102 = vmatpush1.msra.mxu0 0.0
  %103 = vmatprep.subr.mxu0 0.0
  %104 = vmatpush1.msra.mxu0 0.0
  %105 = vmatprep.subr.mxu0 0.0
  %106 = vmatpush1.msra.mxu0 0.0
  %107 = vmatprep.mubr.f32.mxu0 0.0
  %108 = vmatmul.mubr.f32.gmra.mrb[0].mxu0 %v37
  %v109 = vpop.f32.mrb[0].mxu0
  %v110 = vadd.f32 %v33, %v109
  %v111 = vpop.f32.mrb[0].mxu0
  %112 = vdwg.mxu0
  %v113 = vmax.f32 %v110, 0.0
  %v114 = vld [vmem:[%s3] sm:$0xff]
  %v115 = vld [vmem:[%s3 + $0x8] sm:$0xff]
  %v116 = vld [vmem:[%s3 + $0x10] sm:$0xff]
  %v117 = vld [vmem:[%s3 + $0x18] sm:$0xff]
  %v118 = vld [vmem:[%s3 + $0x20] sm:$0xff]
  %v119 = vld [vmem:[%s3 + $0x28] sm:$0xff]
  %v120 = vld [vmem:[%s3 + $0x30] sm:$0xff]
  %v121 = vld [vmem:[%s3 + $0x38] sm:$0xff]
  %v122 = vld [vmem:[%s3 + $0x40] sm:$0xff]
  %v123 = vld [vmem:[%s3 + $0x48] sm:$0xff]
  %v124 = vld [vmem:[%s3 + $0x50] sm:$0xff]
  %v125 = vld [vmem:[%s3 + $0x58] sm:$0xff]
  %v126 = vld [vmem:[%s3 + $0x60] sm:$0xff]
  %v127 = vld [vmem:[%s3 + $0x68] sm:$0xff]
  %v128 = vld [vmem:[%s3 + $0x70] sm:$0xff]
  %v129 = vld [vmem:[%s3 + $0x78] sm:$0xff]
  %v130 = vld [vmem:[%s4] sm:$0x1]
  %v132 = vlaneseq
  %v133 = vshrl.u32 %v132, 7
  %v134 = vsub.s32 0, %v133
  %v135 = vrot.slane %v130, %v134
  %137 = vmatprep.subr.mxu0 0.0
  %138 = vmatpush1.msra.mxu0 %v114
  %139 = vmatprep.subr.mxu0 0.0
  %140 = vmatpush1.msra.mxu0 %v115
  %141 = vmatprep.subr.mxu0 0.0
  %142 = vmatpush1.msra.mxu0 %v116
  %143 = vmatprep.subr.mxu0 0.0
  %144 = vmatpush1.msra.mxu0 %v117
  %145 = vmatprep.subr.mxu0 0.0
  %146 = vmatpush1.msra.mxu0 %v118
  %147 = vmatprep.subr.mxu0 0.0
  %148 = vmatpush1.msra.mxu0 %v119
  %149 = vmatprep.subr.mxu0 0.0
  %150 = vmatpush1.msra.mxu0 %v120
  %151 = vmatprep.subr.mxu0 0.0
  %152 = vmatpush1.msra.mxu0 %v121
  %153 = vmatprep.subr.mxu0 0.0
  %154 = vmatpush1.msra.mxu0 %v122
  %155 = vmatprep.subr.mxu0 0.0
  %156 = vmatpush1.msra.mxu0 %v123
  %157 = vmatprep.subr.mxu0 0.0
  %158 = vmatpush1.msra.mxu0 %v124
  %159 = vmatprep.subr.mxu0 0.0
  %160 = vmatpush1.msra.mxu0 %v125
  %161 = vmatprep.subr.mxu0 0.0
  %162 = vmatpush1.msra.mxu0 %v126
  %163 = vmatprep.subr.mxu0 0.0
  %164 = vmatpush1.msra.mxu0 %v127
  %165 = vmatprep.subr.mxu0 0.0
  %166 = vmatpush1.msra.mxu0 %v128
  %167 = vmatprep.subr.mxu0 0.0
  %168 = vmatpush1.msra.mxu0 %v129
  %169 = vmatprep.subr.mxu0 0.0
  %170 = vmatpush1.msra.mxu0 0.0
  %171 = vmatprep.subr.mxu0 0.0
  %172 = vmatpush1.msra.mxu0 0.0
  %173 = vmatprep.subr.mxu0 0.0
  %174 = vmatpush1.msra.mxu0 0.0
  %175 = vmatprep.subr.mxu0 0.0
  %176 = vmatpush1.msra.mxu0 0.0
  %177 = vmatprep.subr.mxu0 0.0
  %178 = vmatpush1.msra.mxu0 0.0
  %179 = vmatprep.subr.mxu0 0.0
  %180 = vmatpush1.msra.mxu0 0.0
  %181 = vmatprep.subr.mxu0 0.0
  %182 = vmatpush1.msra.mxu0 0.0
  %183 = vmatprep.subr.mxu0 0.0
  %184 = vmatpush1.msra.mxu0 0.0
  %185 = vmatprep.subr.mxu0 0.0
  %186 = vmatpush1.msra.mxu0 0.0
  %187 = vmatprep.subr.mxu0 0.0
  %188 = vmatpush1.msra.mxu0 0.0
  %189 = vmatprep.subr.mxu0 0.0
  %190 = vmatpush1.msra.mxu0 0.0
  %191 = vmatprep.subr.mxu0 0.0
  %192 = vmatpush1.msra.mxu0 0.0
  %193 = vmatprep.subr.mxu0 0.0
  %194 = vmatpush1.msra.mxu0 0.0
  %195 = vmatprep.subr.mxu0 0.0
  %196 = vmatpush1.msra.mxu0 0.0
  %197 = vmatprep.subr.mxu0 0.0
  %198 = vmatpush1.msra.mxu0 0.0
  %199 = vmatprep.subr.mxu0 0.0
  %200 = vmatpush1.msra.mxu0 0.0
  %201 = vmatprep.mubr.f32.mxu0 0.0
  %202 = vmatmul.mubr.f32.gmra.mrb[0].mxu0 %v113
  %v203 = vpop.f32.mrb[0].mxu0
  %v204 = vadd.f32 %v135, %v203
  %v205 = vpop.f32.mrb[0].mxu0
  %206 = vdwg.mxu0
  %v207 = vmax.f32 %v204, 0.0
  %v208 = vld [vmem:[%s5] sm:$0xff]
  %v209 = vld [vmem:[%s5 + $0x8] sm:$0xff]
  %v210 = vld [vmem:[%s5 + $0x10] sm:$0xff]
  %v211 = vld [vmem:[%s5 + $0x18] sm:$0xff]
  %v212 = vld [vmem:[%s5 + $0x20] sm:$0xff]
  %v213 = vld [vmem:[%s5 + $0x28] sm:$0xff]
  %v214 = vld [vmem:[%s5 + $0x30] sm:$0xff]
  %v215 = vld [vmem:[%s5 + $0x38] sm:$0xff]
  %v216 = vld [vmem:[%s5 + $0x40] sm:$0xff]
  %v217 = vld [vmem:[%s5 + $0x48] sm:$0xff]
  %v218 = vld [vmem:[%s5 + $0x50] sm:$0xff]
  %v219 = vld [vmem:[%s5 + $0x58] sm:$0xff]
  %v220 = vld [vmem:[%s5 + $0x60] sm:$0xff]
  %v221 = vld [vmem:[%s5 + $0x68] sm:$0xff]
  %v222 = vld [vmem:[%s5 + $0x70] sm:$0xff]
  %v223 = vld [vmem:[%s5 + $0x78] sm:$0xff]
  %v224 = vld [vmem:[%s6] sm:$0x1]
  %v226 = vlaneseq
  %v227 = vshrl.u32 %v226, 7
  %v228 = vsub.s32 0, %v227
  %v229 = vrot.slane %v224, %v228
  %231 = vmatprep.subr.mxu0 0.0
  %232 = vmatpush1.msra.mxu0 %v208
  %233 = vmatprep.subr.mxu0 0.0
  %234 = vmatpush1.msra.mxu0 %v209
  %235 = vmatprep.subr.mxu0 0.0
  %236 = vmatpush1.msra.mxu0 %v210
  %237 = vmatprep.subr.mxu0 0.0
  %238 = vmatpush1.msra.mxu0 %v211
  %239 = vmatprep.subr.mxu0 0.0
  %240 = vmatpush1.msra.mxu0 %v212
  %241 = vmatprep.subr.mxu0 0.0
  %242 = vmatpush1.msra.mxu0 %v213
  %243 = vmatprep.subr.mxu0 0.0
  %244 = vmatpush1.msra.mxu0 %v214
  %245 = vmatprep.subr.mxu0 0.0
  %246 = vmatpush1.msra.mxu0 %v215
  %247 = vmatprep.subr.mxu0 0.0
  %248 = vmatpush1.msra.mxu0 %v216
  %249 = vmatprep.subr.mxu0 0.0
  %250 = vmatpush1.msra.mxu0 %v217
  %251 = vmatprep.subr.mxu0 0.0
  %252 = vmatpush1.msra.mxu0 %v218
  %253 = vmatprep.subr.mxu0 0.0
  %254 = vmatpush1.msra.mxu0 %v219
  %255 = vmatprep.subr.mxu0 0.0
  %256 = vmatpush1.msra.mxu0 %v220
  %257 = vmatprep.subr.mxu0 0.0
  %258 = vmatpush1.msra.mxu0 %v221
  %259 = vmatprep.subr.mxu0 0.0
  %260 = vmatpush1.msra.mxu0 %v222
  %261 = vmatprep.subr.mxu0 0.0
  %262 = vmatpush1.msra.mxu0 %v223
  %263 = vmatprep.subr.mxu0 0.0
  %264 = vmatpush1.msra.mxu0 0.0
  %265 = vmatprep.subr.mxu0 0.0
  %266 = vmatpush1.msra.mxu0 0.0
  %267 = vmatprep.subr.mxu0 0.0
  %268 = vmatpush1.msra.mxu0 0.0
  %269 = vmatprep.subr.mxu0 0.0
  %270 = vmatpush1.msra.mxu0 0.0
  %271 = vmatprep.subr.mxu0 0.0
  %272 = vmatpush1.msra.mxu0 0.0
  %273 = vmatprep.subr.mxu0 0.0
  %274 = vmatpush1.msra.mxu0 0.0
  %275 = vmatprep.subr.mxu0 0.0
  %276 = vmatpush1.msra.mxu0 0.0
  %277 = vmatprep.subr.mxu0 0.0
  %278 = vmatpush1.msra.mxu0 0.0
  %279 = vmatprep.subr.mxu0 0.0
  %280 = vmatpush1.msra.mxu0 0.0
  %281 = vmatprep.subr.mxu0 0.0
  %282 = vmatpush1.msra.mxu0 0.0
  %283 = vmatprep.subr.mxu0 0.0
  %284 = vmatpush1.msra.mxu0 0.0
  %285 = vmatprep.subr.mxu0 0.0
  %286 = vmatpush1.msra.mxu0 0.0
  %287 = vmatprep.subr.mxu0 0.0
  %288 = vmatpush1.msra.mxu0 0.0
  %289 = vmatprep.subr.mxu0 0.0
  %290 = vmatpush1.msra.mxu0 0.0
  %291 = vmatprep.subr.mxu0 0.0
  %292 = vmatpush1.msra.mxu0 0.0
  %293 = vmatprep.subr.mxu0 0.0
  %294 = vmatpush1.msra.mxu0 0.0
  %295 = vmatprep.mubr.f32.mxu0 0.0
  %296 = vmatmul.mubr.f32.gmra.mrb[0].mxu0 %v207
  %v297 = vpop.f32.mrb[0].mxu0
  %v298 = vadd.f32 %v229, %v297
  %v299 = vpop.f32.mrb[0].mxu0
  %300 = vdwg.mxu0
  %301 = vst [vmem:[%s7] sm:$0xff] %v298
  // Predicated region
  $region30: #{mlp_forward.1} parent=0 // pred_check
    _
  $region31: #{mlp_forward.1} parent=0 // pred_check_branch
    %303 = sbr.rel (0) target = $region33
  $region32: #{mlp_forward.1} parent=0 // pred_region
    _
  $region33: #{mlp_forward.1} parent=0 // pred_fallthru
    _
  // Predicated region
  $region34: #{mlp_forward.1} parent=0 // pred_check
    _
  $region35: #{mlp_forward.1} parent=0 // pred_check_branch
    %305 = sbr.rel (0) target = $region37
  $region36: #{mlp_forward.1} parent=0 // pred_region
    _
  $region37: #{mlp_forward.1} parent=0 // pred_fallthru
    _

</llo_original>
